<compile_context>
chip_gen: v7x
topology: tpu7x:2x2x1
jax: 0.10.0
libtpu: 0.0.40
codegen_flags: <defaults>
</compile_context>

<pallas_src>
import functools

import jax
import jax.numpy as jnp
from jax.experimental import pallas as pl
from jax.experimental.pallas import tpu as pltpu

_LANE = 128     # lane width (last-dim tile)
_SUBLANE = 8    # f32 sublane height (second-to-last-dim tile)


def _round_up(x, m):
    return ((x + m - 1) // m) * m


def _cdiv(a, b):
    return (a + b - 1) // b


# -----------------------------------------------------------------------------
# One-time parameter packing (PyTorch GRUCell layout -> compact, fused).
# -----------------------------------------------------------------------------
def _pack_gru_params(w_ih, w_hh, b_ih, b_hh, compute_dtype):
    """Packs PyTorch-layout GRUCell params into compact fused weights.

    w_ih: (3H, I), w_hh: (3H, H), b_ih/b_hh: (3H,)  (r | z | n chunks).

    Column layout of the gate slab (width Gw = 4*Hg, Hg = gate stride):
      [ r | z | i_n | h_n ]  at offsets 0, Hg, 2*Hg, 3*Hg (each H wide).
    For GRUCell(4, 8): Hg = 32, Gw = 128 -> all four gates in one vreg row.

    Returns dict with:
      w_x  : (Ix, Gw)  x-side weight   (Ix = round_up(I, 8))
      w_h  : (Hc, Gw)  h-side weight   (Hc = round_up(H, 8))
      bias : (1, Gw)   fused bias (f32, added after the f32-accum matmul):
             [b_r_ih+b_r_hh | b_z_ih+b_z_hh | b_n_ih | b_n_hh]
      dims : (I, H, Ix, Hc, Hg, Gw)
    """
    three_h, I = w_ih.shape
    H = w_hh.shape[1]
    assert three_h == 3 * H
    Ix = _round_up(I, _SUBLANE)
    Hc = _round_up(H, _SUBLANE)
    Hg = _round_up(4 * Hc, _LANE) // 4      # gate column stride (>= Hc)
    Gw = 4 * Hg                              # total gate slab width (>= 128)

    w_ih_t = jnp.transpose(w_ih).astype(jnp.float32)   # (I, 3H): [r | z | n]
    w_hh_t = jnp.transpose(w_hh).astype(jnp.float32)   # (H, 3H)

    w_x = jnp.zeros((Ix, Gw), jnp.float32)
    w_x = w_x.at[:I, 0:H].set(w_ih_t[:, 0:H])                        # r
    w_x = w_x.at[:I, Hg:Hg + H].set(w_ih_t[:, H:2 * H])              # z
    w_x = w_x.at[:I, 2 * Hg:2 * Hg + H].set(w_ih_t[:, 2 * H:3 * H])  # i_n

    w_h = jnp.zeros((Hc, Gw), jnp.float32)
    w_h = w_h.at[:H, 0:H].set(w_hh_t[:, 0:H])                        # r
    w_h = w_h.at[:H, Hg:Hg + H].set(w_hh_t[:, H:2 * H])              # z
    w_h = w_h.at[:H, 3 * Hg:3 * Hg + H].set(w_hh_t[:, 2 * H:3 * H])  # h_n

    bias = jnp.zeros((1, Gw), jnp.float32)
    bias = bias.at[0, 0:H].set(b_ih[0:H] + b_hh[0:H])
    bias = bias.at[0, Hg:Hg + H].set(b_ih[H:2 * H] + b_hh[H:2 * H])
    bias = bias.at[0, 2 * Hg:2 * Hg + H].set(b_ih[2 * H:3 * H])
    bias = bias.at[0, 3 * Hg:3 * Hg + H].set(b_hh[2 * H:3 * H])

    return {
        "w_x": w_x.astype(compute_dtype),
        "w_h": w_h.astype(compute_dtype),
        "bias": bias,   # f32: added after the f32-accumulated matmul
        "dims": (I, H, Ix, Hc, Hg, Gw),
    }


# -----------------------------------------------------------------------------
# Shared GRU gate math (f32 elementwise; h leak path is f32).
# -----------------------------------------------------------------------------
def _gru_gate_math(gates, h, gate_stride, hidden_width):
    """gates: (TB, Gw) f32 pre-activations; h: (TB, Hc) f32 previous hidden."""
    hg, hc = gate_stride, hidden_width
    r = jax.nn.sigmoid(gates[:, 0 * hg:0 * hg + hc])
    z = jax.nn.sigmoid(gates[:, 1 * hg:1 * hg + hc])
    n = jnp.tanh(gates[:, 2 * hg:2 * hg + hc] + r * gates[:, 3 * hg:3 * hg + hc])
    return (1.0 - z) * n + z * h


# -----------------------------------------------------------------------------
# Single-step GRUCell kernel (two small dots, compact 128-lane gate slab).
# -----------------------------------------------------------------------------
def _gru_step_kernel(x_ref, h_ref, wx_ref, wh_ref, b_ref, out_ref, *,
                     gate_stride, hidden_width):
    """x_ref: (TB, Ix) compute dtype, h_ref: (TB, Hc) f32,
    wx_ref: (Ix, Gw), wh_ref: (Hc, Gw), b_ref: (1, Gw) f32, out_ref: (TB, Hc)."""
    h = h_ref[...]
    wx = wx_ref[...]
    wh = wh_ref[...]
    gates = (jnp.dot(x_ref[...], wx, preferred_element_type=jnp.float32)
             + jnp.dot(h.astype(wh.dtype), wh, preferred_element_type=jnp.float32)
             + b_ref[...])
    out_ref[...] = _gru_gate_math(gates, h, gate_stride, hidden_width)


def _gru_step_forward(x, h, w_x, w_h, bias, *, input_size, hidden_size,
                      compute_dtype, batch_tile=1024):
    """Single GRUCell step.  Only tiny padding (batch->8, features->8)."""
    I, H = input_size, hidden_size
    Ix, Hc, Gw = w_x.shape[0], w_h.shape[0], bias.shape[1]
    Hg = Gw // 4
    B = x.shape[0]

    n_tiles = _cdiv(B, batch_tile)
    TB = _round_up(_cdiv(B, n_tiles), _SUBLANE)
    Bp = n_tiles * TB

    x_p = jnp.zeros((Bp, Ix), compute_dtype).at[:B, :I].set(
        x.astype(compute_dtype))
    h_p = jnp.zeros((Bp, Hc), jnp.float32).at[:B, :H].set(
        h.astype(jnp.float32))

    kernel = functools.partial(_gru_step_kernel, gate_stride=Hg,
                               hidden_width=Hc)
    out = pl.pallas_call(
        kernel,
        out_shape=jax.ShapeDtypeStruct((Bp, Hc), jnp.float32),
        grid_spec=pltpu.PrefetchScalarGridSpec(
            num_scalar_prefetch=0,
            grid=(n_tiles,),
            in_specs=[
                pl.BlockSpec((TB, Ix), lambda i: (i, 0)),     # x tile
                pl.BlockSpec((TB, Hc), lambda i: (i, 0)),     # h tile (f32)
                pl.BlockSpec((Ix, Gw), lambda i: (0, 0)),     # W_x (resident)
                pl.BlockSpec((Hc, Gw), lambda i: (0, 0)),     # W_h (resident)
                pl.BlockSpec((1, Gw), lambda i: (0, 0)),      # bias (resident)
            ],
            out_specs=pl.BlockSpec((TB, Hc), lambda i: (i, 0)),
        ),
        compiler_params=pltpu.CompilerParams(
            dimension_semantics=("parallel",)),  # batch -> 2 TCs on v7x
    )(x_p, h_p, w_x, w_h, bias)

    return out[:B, :H].astype(x.dtype)   # no-op slices when B, H already align


# -----------------------------------------------------------------------------
# Fused-sequence kernel: Tc time steps per grid iteration, h resident in VMEM.
# -----------------------------------------------------------------------------
def _gru_seq_kernel(xs_ref, h0_ref, wx_ref, wh_ref, b_ref, out_ref, h_scr, *,
                    gate_stride, hidden_width, chunk):
    """Grid = (batch_tiles, time_chunks); time is the inner (arbitrary) axis."""
    @pl.when(pl.program_id(1) == 0)      # re-init h per batch tile
    def _():
        h_scr[...] = h0_ref[...]

    wx = wx_ref[...]
    wh = wh_ref[...]
    b = b_ref[...]

    def step(tt, h):
        gates = (jnp.dot(xs_ref[tt], wx, preferred_element_type=jnp.float32)
                 + jnp.dot(h.astype(wh.dtype), wh,
                           preferred_element_type=jnp.float32)
                 + b)
        h_new = _gru_gate_math(gates, h, gate_stride, hidden_width)
        out_ref[tt] = h_new
        return h_new

    # Hidden state never leaves VMEM between time steps / chunks.
    h_scr[...] = jax.lax.fori_loop(0, chunk, step, h_scr[...], unroll=True)


def gru_sequence_pallas(xs, h0, w_x, w_h, bias, *, input_size, hidden_size,
                        compute_dtype, time_chunk=16, batch_tile=256):
    """Runs T GRUCell steps in ONE pallas_call (chunked time grid)."""
    I, H = input_size, hidden_size
    Ix, Hc, Gw = w_x.shape[0], w_h.shape[0], bias.shape[1]
    Hg = Gw // 4
    T, B, _ = xs.shape

    Tc = min(time_chunk, T)
    Tp = _round_up(T, Tc)
    n_chunks = Tp // Tc

    n_btiles = _cdiv(B, batch_tile)
    TB = _round_up(_cdiv(B, n_btiles), _SUBLANE)
    Bp = n_btiles * TB

    xs_p = jnp.zeros((Tp, Bp, Ix), compute_dtype)
    xs_p = xs_p.at[:T, :B, :I].set(xs.astype(compute_dtype))
    h0_p = jnp.zeros((Bp, Hc), jnp.float32).at[:B, :H].set(
        h0.astype(jnp.float32))

    kernel = functools.partial(_gru_seq_kernel, gate_stride=Hg,
                               hidden_width=Hc, chunk=Tc)
    out = pl.pallas_call(
        kernel,
        out_shape=jax.ShapeDtypeStruct((Tp, Bp, Hc), jnp.float32),
        grid_spec=pltpu.PrefetchScalarGridSpec(
            num_scalar_prefetch=0,
            grid=(n_btiles, n_chunks),      # batch OUTER, time-chunks inner
            in_specs=[
                pl.BlockSpec((Tc, TB, Ix), lambda b, c: (c, b, 0)),  # x chunk
                pl.BlockSpec((TB, Hc), lambda b, c: (b, 0)),         # h0 tile
                pl.BlockSpec((Ix, Gw), lambda b, c: (0, 0)),         # W_x
                pl.BlockSpec((Hc, Gw), lambda b, c: (0, 0)),         # W_h
                pl.BlockSpec((1, Gw), lambda b, c: (0, 0)),          # bias
            ],
            out_specs=pl.BlockSpec((Tc, TB, Hc), lambda b, c: (c, b, 0)),
            scratch_shapes=[pltpu.VMEM((TB, Hc), jnp.float32)],      # resident h
        ),
        compiler_params=pltpu.CompilerParams(
            dimension_semantics=("parallel", "arbitrary")),
    )(xs_p, h0_p, w_x, w_h, bias)

    return out[:T, :B, :H].astype(xs.dtype)


# -----------------------------------------------------------------------------
# TensorDictModule analogue.
# -----------------------------------------------------------------------------
class TensorDictModuleJAX:
    """JAX analogue of torchrl's TensorDictModule wrapping a GRUCell.

    Reads `in_keys` from a plain dict (the "tensordict"), runs the embedded
    Pallas-backed GRUCell, writes the result under `out_keys`, and returns the
    dict — mirroring TensorDictModule.forward semantics.  Parameters are
    transposed / fused / compacted once at construction.
    """

    def __init__(self, params, in_keys, out_keys,
                 compute_dtype=jnp.bfloat16):   # bf16 MXU operands by default
        if not out_keys:
            raise RuntimeError("out_keys were not passed to TensorDictModuleJAX")
        if not in_keys:
            raise RuntimeError("in_keys were not passed to TensorDictModuleJAX")
        if isinstance(in_keys, str) or isinstance(out_keys, str):
            raise RuntimeError("Expected a list of strings, got a string")
        self.in_keys = list(in_keys)
        self.out_keys = list(out_keys)
        # TODO(synk): `safe=True` spec-projection hook (TensorSpec.project) and
        # the functorch/vmap functional-module paths have no Pallas equivalent.

        packed = _pack_gru_params(
            params["weight_ih"], params["weight_hh"],
            params["bias_ih"], params["bias_hh"], compute_dtype)
        self._w_x = packed["w_x"]
        self._w_h = packed["w_h"]
        self._bias = packed["bias"]
        I, H = packed["dims"][:2]
        self.input_size, self.hidden_size = I, H

        self._step = jax.jit(functools.partial(
            _gru_step_forward, input_size=I, hidden_size=H,
            compute_dtype=compute_dtype))
        self._seq = jax.jit(functools.partial(
            gru_sequence_pallas, input_size=I, hidden_size=H,
            compute_dtype=compute_dtype))

    def __call__(self, tensordict):
        tensors = tuple(tensordict.get(k, None) for k in self.in_keys)
        out = self._step(tensors[0], tensors[1], self._w_x, self._w_h,
                         self._bias)
        for key, tensor in zip(self.out_keys, (out,)):
            if key != "_":
                tensordict[key] = tensor
        return tensordict

    def rollout(self, xs, h0):
        """Applies the embedded GRUCell over a leading time axis with the
        hidden state resident in VMEM (single fused, time-chunked pallas_call)."""
        return self._seq(xs, h0, self._w_x, self._w_h, self._bias)


# -----------------------------------------------------------------------------
# Pure-JAX reference (matches torch.nn.GRUCell).
# -----------------------------------------------------------------------------
def _reference_gru_cell(x, h, w_ih, w_hh, b_ih, b_hh):
    gi = x @ w_ih.T + b_ih
    gh = h @ w_hh.T + b_hh
    i_r, i_z, i_n = jnp.split(gi, 3, axis=-1)
    h_r, h_z, h_n = jnp.split(gh, 3, axis=-1)
    r = jax.nn.sigmoid(i_r + h_r)
    z = jax.nn.sigmoid(i_z + h_z)
    n = jnp.tanh(i_n + r * h_n)
    return (1.0 - z) * n + z * h


if __name__ == "__main__":
    input_size, hidden_size, batch, seq = 4, 8, 3, 8

    key = jax.random.PRNGKey(0)
    k_x, k_h, k_wih, k_whh, k_bih, k_bhh, k_seq = jax.random.split(key, 7)

    # PyTorch GRUCell-style uniform(-1/sqrt(H), 1/sqrt(H)) init.
    bound = 1.0 / jnp.sqrt(jnp.float32(hidden_size))
    params = {
        "weight_ih": jax.random.uniform(
            k_wih, (3 * hidden_size, input_size), jnp.float32, -bound, bound),
        "weight_hh": jax.random.uniform(
            k_whh, (3 * hidden_size, hidden_size), jnp.float32, -bound, bound),
        "bias_ih": jax.random.uniform(
            k_bih, (3 * hidden_size,), jnp.float32, -bound, bound),
        "bias_hh": jax.random.uniform(
            k_bhh, (3 * hidden_size,), jnp.float32, -bound, bound),
    }

    td = {
        "input": jax.random.normal(k_x, (batch, input_size), jnp.float32),
        "hidden": jax.random.normal(k_h, (batch, hidden_size), jnp.float32),
    }

    ref = _reference_gru_cell(
        td["input"], td["hidden"],
        params["weight_ih"], params["weight_hh"],
        params["bias_ih"], params["bias_hh"])

    # --- 1. single-step forward, f32 matmul operands (tight tolerance) -------
    td_module_f32 = TensorDictModuleJAX(
        params, in_keys=["input", "hidden"], out_keys=["output"],
        compute_dtype=jnp.float32)
    out_f32 = jax.block_until_ready(td_module_f32(dict(td))["output"])
    assert out_f32.shape == (batch, hidden_size)
    assert out_f32.dtype == jnp.float32
    assert jnp.allclose(out_f32, ref, atol=1e-5, rtol=1e-5), (
        f"f32 step: max abs err = {jnp.max(jnp.abs(out_f32 - ref))}")

    # --- 2. single-step TensorDictModule forward, default bf16 MXU operands --
    td_module = TensorDictModuleJAX(
        params, in_keys=["input", "hidden"], out_keys=["output"])
    td_out = td_module(dict(td))
    out_bf16 = jax.block_until_ready(td_out["output"])
    assert out_bf16.shape == (batch, hidden_size)
    assert jnp.allclose(out_bf16, ref, atol=5e-2), (
        f"bf16 step: max abs err = {jnp.max(jnp.abs(out_bf16 - ref))}")

    # --- 3. fused-sequence rollout (hidden state resident in VMEM) -----------
    xs = jax.random.normal(k_seq, (seq, batch, input_size), jnp.float32)

    def scan_ref(h, x):
        h_new = _reference_gru_cell(
            x, h, params["weight_ih"], params["weight_hh"],
            params["bias_ih"], params["bias_hh"])
        return h_new, h_new

    _, hs_ref = jax.lax.scan(scan_ref, td["hidden"], xs)

    hs_f32 = jax.block_until_ready(td_module_f32.rollout(xs, td["hidden"]))
    assert hs_f32.shape == (seq, batch, hidden_size)
    assert jnp.allclose(hs_f32, hs_ref, atol=1e-4, rtol=1e-4), (
        f"f32 seq: max abs err = {jnp.max(jnp.abs(hs_f32 - hs_ref))}")

    hs_bf16 = jax.block_until_ready(td_module.rollout(xs, td["hidden"]))
    assert hs_bf16.shape == (seq, batch, hidden_size)
    assert jnp.allclose(hs_bf16, hs_ref, atol=1e-1), (
        f"bf16 seq: max abs err = {jnp.max(jnp.abs(hs_bf16 - hs_ref))}")

    print("KERNEL_OK")
</pallas_src>

<mosaic_0001>
module attributes {stable_mosaic.version = 11 : i64} {
  func.func @_gru_step_kernel(%arg0: i32, %arg1: memref<8x8xf32, #tpu.memory_space<vmem>>, %arg2: memref<8x8xf32, #tpu.memory_space<vmem>>, %arg3: memref<8x128xf32, #tpu.memory_space<vmem>>, %arg4: memref<8x128xf32, #tpu.memory_space<vmem>>, %arg5: memref<1x128xf32, #tpu.memory_space<vmem>>, %arg6: memref<8x8xf32, #tpu.memory_space<vmem>>) attributes {dimension_semantics = [#tpu.dimension_semantics<parallel>], iteration_bounds = array<i64: 1>, scalar_prefetch = 0 : i64, scratch_operands = 0 : i64, tpu.core_type = #tpu.core_type<tc>, window_params = [{transform_indices = @transform_0, window_bounds = array<i64: 8, 8>}, {transform_indices = @transform_1, window_bounds = array<i64: 8, 8>}, {pipeline_mode = #tpu.pipeline_mode<synchronous>, transform_indices = @transform_2, window_bounds = array<i64: 8, 128>}, {pipeline_mode = #tpu.pipeline_mode<synchronous>, transform_indices = @transform_3, window_bounds = array<i64: 8, 128>}, {pipeline_mode = #tpu.pipeline_mode<synchronous>, transform_indices = @transform_4, window_bounds = array<i64: 1, 128>}, {transform_indices = @transform_5, window_bounds = array<i64: 8, 8>}]} {
    %c0 = arith.constant 0 : index
    %c0_0 = arith.constant 0 : index
    %0 = vector.load %arg2[%c0, %c0_0] : memref<8x8xf32, #tpu.memory_space<vmem>>, vector<8x8xf32>
    %c0_1 = arith.constant 0 : index
    %c0_2 = arith.constant 0 : index
    %1 = vector.load %arg3[%c0_1, %c0_2] : memref<8x128xf32, #tpu.memory_space<vmem>>, vector<8x128xf32>
    %c0_3 = arith.constant 0 : index
    %c0_4 = arith.constant 0 : index
    %2 = vector.load %arg4[%c0_3, %c0_4] : memref<8x128xf32, #tpu.memory_space<vmem>>, vector<8x128xf32>
    %c0_5 = arith.constant 0 : index
    %c0_6 = arith.constant 0 : index
    %3 = vector.load %arg1[%c0_5, %c0_6] : memref<8x8xf32, #tpu.memory_space<vmem>>, vector<8x8xf32>
    %cst = arith.constant dense<0.000000e+00> : vector<8x128xf32>
    %4 = tpu.matmul %3, %1, %cst {dimension_numbers = #tpu.dot_dimension_numbers<[1], [0], [0], [1], [0, 0, 1, 1], [], []>} : vector<8x8xf32>, vector<8x128xf32>, vector<8x128xf32> -> vector<8x128xf32>
    %cst_7 = arith.constant dense<0.000000e+00> : vector<8x128xf32>
    %5 = tpu.matmul %0, %2, %cst_7 {dimension_numbers = #tpu.dot_dimension_numbers<[1], [0], [0], [1], [0, 0, 1, 1], [], []>} : vector<8x8xf32>, vector<8x128xf32>, vector<8x128xf32> -> vector<8x128xf32>
    %6 = arith.addf %4, %5 : vector<8x128xf32>
    %c0_8 = arith.constant 0 : index
    %c0_9 = arith.constant 0 : index
    %7 = vector.load %arg5[%c0_8, %c0_9] : memref<1x128xf32, #tpu.memory_space<vmem>>, vector<1x128xf32>
    %8 = vector.broadcast %7 : vector<1x128xf32> to vector<8x128xf32>
    %9 = arith.addf %6, %8 : vector<8x128xf32>
    %10 = vector.extract_strided_slice %9 {offsets = [0, 0], sizes = [8, 8], strides = [1, 1]} : vector<8x128xf32> to vector<8x8xf32>
    %11 = arith.negf %10 : vector<8x8xf32>
    %12 = math.exp %11 : vector<8x8xf32>
    %cst_10 = arith.constant 1.000000e+00 : f32
    %13 = vector.broadcast %cst_10 : f32 to vector<8x8xf32>
    %14 = arith.addf %13, %12 : vector<8x8xf32>
    %15 = arith.divf %13, %14 : vector<8x8xf32>
    %16 = vector.extract_strided_slice %9 {offsets = [0, 32], sizes = [8, 8], strides = [1, 1]} : vector<8x128xf32> to vector<8x8xf32>
    %17 = arith.negf %16 : vector<8x8xf32>
    %18 = math.exp %17 : vector<8x8xf32>
    %cst_11 = arith.constant 1.000000e+00 : f32
    %19 = vector.broadcast %cst_11 : f32 to vector<8x8xf32>
    %20 = arith.addf %19, %18 : vector<8x8xf32>
    %21 = arith.divf %19, %20 : vector<8x8xf32>
    %22 = vector.extract_strided_slice %9 {offsets = [0, 64], sizes = [8, 8], strides = [1, 1]} : vector<8x128xf32> to vector<8x8xf32>
    %23 = vector.extract_strided_slice %9 {offsets = [0, 96], sizes = [8, 8], strides = [1, 1]} : vector<8x128xf32> to vector<8x8xf32>
    %24 = arith.mulf %15, %23 : vector<8x8xf32>
    %25 = arith.addf %22, %24 : vector<8x8xf32>
    %26 = math.tanh %25 : vector<8x8xf32>
    %cst_12 = arith.constant 1.000000e+00 : f32
    %27 = vector.broadcast %cst_12 : f32 to vector<8x8xf32>
    %28 = arith.subf %27, %21 : vector<8x8xf32>
    %29 = arith.mulf %28, %26 : vector<8x8xf32>
    %30 = arith.mulf %21, %0 : vector<8x8xf32>
    %31 = arith.addf %29, %30 : vector<8x8xf32>
    %c0_13 = arith.constant 0 : index
    %c0_14 = arith.constant 0 : index
    %32 = vector.load %arg6[%c0_13, %c0_14] : memref<8x8xf32, #tpu.memory_space<vmem>>, vector<8x8xf32>
    tpu.vector_store %arg6[%c0_13, %c0_14], %31 {strides = array<i32>} : memref<8x8xf32, #tpu.memory_space<vmem>>, vector<8x8xf32>,
    return
  }
  func.func @transform_0(%arg0: i32) -> (i32, i32) {
    %c0_i32 = arith.constant 0 : i32
    %c0_i32_0 = arith.constant 0 : i32
    return %arg0, %c0_i32 : i32, i32
  }
  func.func @transform_1(%arg0: i32) -> (i32, i32) {
    %c0_i32 = arith.constant 0 : i32
    %c0_i32_0 = arith.constant 0 : i32
    return %arg0, %c0_i32 : i32, i32
  }
  func.func @transform_2(%arg0: i32) -> (i32, i32) {
    %c0_i32 = arith.constant 0 : i32
    %c0_i32_0 = arith.constant 0 : i32
    %c0_i32_1 = arith.constant 0 : i32
    return %c0_i32, %c0_i32_0 : i32, i32
  }
  func.func @transform_3(%arg0: i32) -> (i32, i32) {
    %c0_i32 = arith.constant 0 : i32
    %c0_i32_0 = arith.constant 0 : i32
    %c0_i32_1 = arith.constant 0 : i32
    return %c0_i32, %c0_i32_0 : i32, i32
  }
  func.func @transform_4(%arg0: i32) -> (i32, i32) {
    %c0_i32 = arith.constant 0 : i32
    %c0_i32_0 = arith.constant 0 : i32
    %c0_i32_1 = arith.constant 0 : i32
    return %c0_i32, %c0_i32_0 : i32, i32
  }
  func.func @transform_5(%arg0: i32) -> (i32, i32) {
    %c0_i32 = arith.constant 0 : i32
    %c0_i32_0 = arith.constant 0 : i32
    return %arg0, %c0_i32 : i32, i32
  }
}

</mosaic_0001>

<llo_original>
// kernel: _gru_step_forward.1
$region0: #{_gru_step_forward.1}
  #allocation0 [shape = 'u32[]', space=smem, size = 0x4, offset = 0x4, fixed_abs, tag = 'smem constant byte address 0x4 - core index']
  #allocation1 [shape = 'u32[144,128]{1,0:T(1,128)}', space=vmem, size = 0x12000, scoped, tag = 'internal scratch']
  %s0 = inlined_call_operand.vmem [shape: f32[8,8], index: 0, kind: input, shape index: {}]
  %s1 = inlined_call_operand.vmem [shape: f32[8,8], index: 1, kind: input, shape index: {}]
  %s2 = inlined_call_operand.vmem [shape: f32[8,128], index: 2, kind: input, shape index: {}]
  %s3 = inlined_call_operand.vmem [shape: f32[8,128], index: 3, kind: input, shape index: {}]
  %s4 = inlined_call_operand.vmem [shape: f32[1,128], index: 4, kind: input, shape index: {}]
  %s5 = inlined_call_operand.vmem [shape: f32[8,8], index: 5, kind: output, shape index: {}]
  %s6 = sld [smem:[#allocation0]]
  $region30: #{_gru_step_forward.1} parent=0
    _
  %s8 = ssub.s32 1, %s6
  %s9 = scalar_select 0, %s8, %s6
  // Predicated region
  $region2: #{_gru_step_forward.1} parent=0 // pred_check
    _
  $region3: #{_gru_step_forward.1} parent=0 // pred_check_branch
    %11 = sbr.rel (0) target = $region5
  $region4: #{_gru_step_forward.1} parent=0 // pred_region
    _
  $region5: #{_gru_step_forward.1} parent=0 // pred_fallthru
    _
  // Predicated region
  $region6: #{_gru_step_forward.1} parent=0 // pred_check
    _
  $region7: #{_gru_step_forward.1} parent=0 // pred_check_branch
    %13 = sbr.rel (0) target = $region9
  $region8: #{_gru_step_forward.1} parent=0 // pred_region
    _
  $region9: #{_gru_step_forward.1} parent=0 // pred_fallthru
    _
  // Predicated region
  $region10: #{_gru_step_forward.1} parent=0 // pred_check
    _
  $region11: #{_gru_step_forward.1} parent=0 // pred_check_branch
    %15 = sbr.rel (0) target = $region13
  $region12: #{_gru_step_forward.1} parent=0 // pred_region
    _
  $region13: #{_gru_step_forward.1} parent=0 // pred_fallthru
    _
  // Predicated region
  $region14: #{_gru_step_forward.1} parent=0 // pred_check
    _
  $region15: #{_gru_step_forward.1} parent=0 // pred_check_branch
    %17 = sbr.rel (0) target = $region17
  $region16: #{_gru_step_forward.1} parent=0 // pred_region
    _
  $region17: #{_gru_step_forward.1} parent=0 // pred_fallthru
    _
  // Predicated region
  $region18: #{_gru_step_forward.1} parent=0 // pred_check
    _
  $region19: #{_gru_step_forward.1} parent=0 // pred_check_branch
    %19 = sbr.rel (0) target = $region21
  $region20: #{_gru_step_forward.1} parent=0 // pred_region
    _
  $region21: #{_gru_step_forward.1} parent=0 // pred_fallthru
    _
  %v20 = vld [vmem:[%s1] sm:$0xff]
  %v21 = vld [vmem:[%s2] sm:$0xff]
  %v22 = vld [vmem:[%s3] sm:$0xff]
  %v23 = vld [vmem:[%s0] sm:$0xff]
  %vm24 = vcmask 64512
  %v26 = vsel %vm24, %v20, 0
  %28 = vmatprep.subr.mxu0 0.0
  %29 = vmatpush1.msra.mxu0 %v22
  %30 = vmatprep.subr.mxu0 0.0
  %31 = vmatpush1.msra.mxu0 0.0
  %32 = vmatprep.subr.mxu0 0.0
  %33 = vmatpush1.msra.mxu0 0.0
  %34 = vmatprep.subr.mxu0 0.0
  %35 = vmatpush1.msra.mxu0 0.0
  %36 = vmatprep.subr.mxu0 0.0
  %37 = vmatpush1.msra.mxu0 0.0
  %38 = vmatprep.subr.mxu0 0.0
  %39 = vmatpush1.msra.mxu0 0.0
  %40 = vmatprep.subr.mxu0 0.0
  %41 = vmatpush1.msra.mxu0 0.0
  %42 = vmatprep.subr.mxu0 0.0
  %43 = vmatpush1.msra.mxu0 0.0
  %44 = vmatprep.subr.mxu0 0.0
  %45 = vmatpush1.msra.mxu0 0.0
  %46 = vmatprep.subr.mxu0 0.0
  %47 = vmatpush1.msra.mxu0 0.0
  %48 = vmatprep.subr.mxu0 0.0
  %49 = vmatpush1.msra.mxu0 0.0
  %50 = vmatprep.subr.mxu0 0.0
  %51 = vmatpush1.msra.mxu0 0.0
  %52 = vmatprep.subr.mxu0 0.0
  %53 = vmatpush1.msra.mxu0 0.0
  %54 = vmatprep.subr.mxu0 0.0
  %55 = vmatpush1.msra.mxu0 0.0
  %56 = vmatprep.subr.mxu0 0.0
  %57 = vmatpush1.msra.mxu0 0.0
  %58 = vmatprep.subr.mxu0 0.0
  %59 = vmatpush1.msra.mxu0 0.0
  %60 = vmatprep.subr.mxu0 0.0
  %61 = vmatpush1.msra.mxu0 0.0
  %62 = vmatprep.subr.mxu0 0.0
  %63 = vmatpush1.msra.mxu0 0.0
  %64 = vmatprep.subr.mxu0 0.0
  %65 = vmatpush1.msra.mxu0 0.0
  %66 = vmatprep.subr.mxu0 0.0
  %67 = vmatpush1.msra.mxu0 0.0
  %68 = vmatprep.subr.mxu0 0.0
  %69 = vmatpush1.msra.mxu0 0.0
  %70 = vmatprep.subr.mxu0 0.0
  %71 = vmatpush1.msra.mxu0 0.0
  %72 = vmatprep.subr.mxu0 0.0
  %73 = vmatpush1.msra.mxu0 0.0
  %74 = vmatprep.subr.mxu0 0.0
  %75 = vmatpush1.msra.mxu0 0.0
  %76 = vmatprep.subr.mxu0 0.0
  %77 = vmatpush1.msra.mxu0 0.0
  %78 = vmatprep.subr.mxu0 0.0
  %79 = vmatpush1.msra.mxu0 0.0
  %80 = vmatprep.subr.mxu0 0.0
  %81 = vmatpush1.msra.mxu0 0.0
  %82 = vmatprep.subr.mxu0 0.0
  %83 = vmatpush1.msra.mxu0 0.0
  %84 = vmatprep.subr.mxu0 0.0
  %85 = vmatpush1.msra.mxu0 0.0
  %86 = vmatprep.subr.mxu0 0.0
  %87 = vmatpush1.msra.mxu0 0.0
  %88 = vmatprep.subr.mxu0 0.0
  %89 = vmatpush1.msra.mxu0 0.0
  %90 = vmatprep.subr.mxu0 0.0
  %91 = vmatpush1.msra.mxu0 0.0
  %92 = vmatprep.mubr.f32.mxu0 0.0
  %93 = vmatmul.mubr.f32.gmra.mrb[0].mxu0 %v26
  %v94 = vpop.f32.mrb[0].mxu0
  %v95 = vadd.f32 0.0, %v94
  %v96 = vpop.f32.mrb[0].mxu0
  %97 = vdwg.mxu0
  %v99 = vsel %vm24, %v23, 0
  %101 = vmatprep.subr.mxu0 0.0
  %102 = vmatpush1.msra.mxu0 %v21
  %103 = vmatprep.subr.mxu0 0.0
  %104 = vmatpush1.msra.mxu0 0.0
  %105 = vmatprep.subr.mxu0 0.0
  %106 = vmatpush1.msra.mxu0 0.0
  %107 = vmatprep.subr.mxu0 0.0
  %108 = vmatpush1.msra.mxu0 0.0
  %109 = vmatprep.subr.mxu0 0.0
  %110 = vmatpush1.msra.mxu0 0.0
  %111 = vmatprep.subr.mxu0 0.0
  %112 = vmatpush1.msra.mxu0 0.0
  %113 = vmatprep.subr.mxu0 0.0
  %114 = vmatpush1.msra.mxu0 0.0
  %115 = vmatprep.subr.mxu0 0.0
  %116 = vmatpush1.msra.mxu0 0.0
  %117 = vmatprep.subr.mxu0 0.0
  %118 = vmatpush1.msra.mxu0 0.0
  %119 = vmatprep.subr.mxu0 0.0
  %120 = vmatpush1.msra.mxu0 0.0
  %121 = vmatprep.subr.mxu0 0.0
  %122 = vmatpush1.msra.mxu0 0.0
  %123 = vmatprep.subr.mxu0 0.0
  %124 = vmatpush1.msra.mxu0 0.0
  %125 = vmatprep.subr.mxu0 0.0
  %126 = vmatpush1.msra.mxu0 0.0
  %127 = vmatprep.subr.mxu0 0.0
  %128 = vmatpush1.msra.mxu0 0.0
  %129 = vmatprep.subr.mxu0 0.0
  %130 = vmatpush1.msra.mxu0 0.0
  %131 = vmatprep.subr.mxu0 0.0
  %132 = vmatpush1.msra.mxu0 0.0
  %133 = vmatprep.subr.mxu0 0.0
  %134 = vmatpush1.msra.mxu0 0.0
  %135 = vmatprep.subr.mxu0 0.0
  %136 = vmatpush1.msra.mxu0 0.0
  %137 = vmatprep.subr.mxu0 0.0
  %138 = vmatpush1.msra.mxu0 0.0
  %139 = vmatprep.subr.mxu0 0.0
  %140 = vmatpush1.msra.mxu0 0.0
  %141 = vmatprep.subr.mxu0 0.0
  %142 = vmatpush1.msra.mxu0 0.0
  %143 = vmatprep.subr.mxu0 0.0
  %144 = vmatpush1.msra.mxu0 0.0
  %145 = vmatprep.subr.mxu0 0.0
  %146 = vmatpush1.msra.mxu0 0.0
  %147 = vmatprep.subr.mxu0 0.0
  %148 = vmatpush1.msra.mxu0 0.0
  %149 = vmatprep.subr.mxu0 0.0
  %150 = vmatpush1.msra.mxu0 0.0
  %151 = vmatprep.subr.mxu0 0.0
  %152 = vmatpush1.msra.mxu0 0.0
  %153 = vmatprep.subr.mxu0 0.0
  %154 = vmatpush1.msra.mxu0 0.0
  %155 = vmatprep.subr.mxu0 0.0
  %156 = vmatpush1.msra.mxu0 0.0
  %157 = vmatprep.subr.mxu0 0.0
  %158 = vmatpush1.msra.mxu0 0.0
  %159 = vmatprep.subr.mxu0 0.0
  %160 = vmatpush1.msra.mxu0 0.0
  %161 = vmatprep.subr.mxu0 0.0
  %162 = vmatpush1.msra.mxu0 0.0
  %163 = vmatprep.subr.mxu0 0.0
  %164 = vmatpush1.msra.mxu0 0.0
  %165 = vmatprep.mubr.f32.mxu0 0.0
  %166 = vmatmul.mubr.f32.gmra.mrb[0].mxu0 %v99
  %v167 = vpop.f32.mrb[0].mxu0
  %v168 = vadd.f32 %v95, %v167
  %v169 = vpop.f32.mrb[0].mxu0
  %170 = vdwg.mxu0
  %v171 = vld [vmem:[%s4] sm:$0x1]
  %v173 = vlaneseq
  %v174 = vshrl.u32 %v173, 7
  %v175 = vsub.s32 0, %v174
  %v176 = vrot.slane %v171, %v175
  %v178 = vadd.f32 %v168, %v176
  %v179 = vxor.u32 %v178, 2147483648
  %v180 = vmul.f32 %v179, 1.442695
  %v181 = vpow.pop %v180
  %v182 = vadd.f32 %v181, 1.0
  %v183 = vrcp.pop %v182
  %v184 = vmul.f32 1.0, %v183
  %186 = vrot.lane.b32.xlu0 %v178, 32
  %v187 = vpop.permute.xlu0 %186
  %v189 = vmul.f32 %v184, %v187
  %191 = vrot.lane.b32.xlu0 %v189, 64
  %v192 = vpop.permute.xlu0 %191
  %v194 = vadd.f32 %v178, %v192
  %v195 = vtanh.pop %v194
  %v196 = vsub.f32 1.0, %v184
  %198 = vrot.lane.b32.xlu0 %v195, 96
  %v199 = vpop.permute.xlu0 %198
  %v201 = vmul.f32 %v196, %v199
  %202 = vrot.lane.b32.xlu0 %v20, 32
  %v203 = vpop.permute.xlu0 %202
  %v205 = vmul.f32 %v184, %v203
  %v206 = vadd.f32 %v201, %v205
  %208 = vrot.lane.b32.xlu0 %v206, 96
  %v209 = vpop.permute.xlu0 %208
  %211 = vst.msk [vmem:[%s5] sm:$0xff] %vm24, %v209
  // Predicated region
  $region22: #{_gru_step_forward.1} parent=0 // pred_check
    _
  $region23: #{_gru_step_forward.1} parent=0 // pred_check_branch
    %213 = sbr.rel (0) target = $region25
  $region24: #{_gru_step_forward.1} parent=0 // pred_region
    _
  $region25: #{_gru_step_forward.1} parent=0 // pred_fallthru
    _
  // Predicated region
  $region26: #{_gru_step_forward.1} parent=0 // pred_check
    _
  $region27: #{_gru_step_forward.1} parent=0 // pred_check_branch
    %215 = sbr.rel (0) target = $region29
  $region28: #{_gru_step_forward.1} parent=0 // pred_region
    _
  $region29: #{_gru_step_forward.1} parent=0 // pred_fallthru
    _

</llo_original>
